<compile_context>
chip_gen: v7x
topology: tpu7x:2x2x1
jax: 0.10.0
libtpu: 0.0.40
codegen_flags: <defaults>
</compile_context>

<pallas_src>
import functools

import jax
import jax.numpy as jnp
from jax.experimental import pallas as pl
from jax.experimental.pallas import tpu as pltpu

_MIB = 1024 * 1024


def _round_up(x, m):
    return (x + m - 1) // m * m


def _memory_encoder_kernel(feat_ref, mask_ref, out_ref, acc_ref, msum_ref,
                           *, total_s, s_tile, has_tail):
    # feat_ref: [1, tC, tS]   VMEM tile (one batch element, one C block), f32
    # mask_ref: [1, O,  tS]   VMEM tile, any float dtype (upcast in-kernel)
    # out_ref : [1, O,  tC]   written only on the last S step  ([B, O, C] out)
    # acc_ref : [tC, O]  f32  scratch accumulator  (sum_s feat * mask)
    # msum_ref: [O,  1]  f32  scratch accumulator  (sum_s mask)
    s = pl.program_id(2)

    @pl.when(s == 0)
    def _init():
        acc_ref[...] = jnp.zeros_like(acc_ref)
        msum_ref[...] = jnp.zeros_like(msum_ref)

    feat = feat_ref[0]                          # [tC, tS]
    mask = mask_ref[0].astype(jnp.float32)      # [O,  tS]

    if has_tail:
        # The last S block extends past S: its out-of-bounds VMEM lanes hold
        # unspecified data (possibly NaN/Inf), so zero BOTH operands there.
        # For all earlier steps `limit >= s_tile`, making the select a no-op;
        # the VPU cost is hidden under the HBM-bound DMA.
        lane = jax.lax.broadcasted_iota(jnp.int32, (1, s_tile), 1)
        limit = total_s - s * s_tile
        valid = lane < limit
        feat = jnp.where(valid, feat, 0.0)
        mask = jnp.where(valid, mask, 0.0)

    # sum_feat[c, o] += sum_s feat[c, s] * mask[o, s].
    # feat is the lhs, so only the skinny [O, tS] mask operand needs the
    # MXU-feeding transpose (not the wide [tC, tS] feat tile).
    acc_ref[...] += jax.lax.dot_general(
        feat, mask,
        dimension_numbers=(((1,), (1,)), ((), ())),
        preferred_element_type=jnp.float32,
    )

    # Mask-sum on the XLU (lane reduction); the XLU has slack here since only
    # the skinny mask transpose uses it.
    msum_ref[...] += jnp.sum(mask, axis=-1, keepdims=True)    # [O, 1]

    @pl.when(s == pl.num_programs(2) - 1)
    def _finalize():
        # clamp-then-divide, exactly as in the PyTorch module.  One small
        # [tC, O] -> [O, tC] transpose per (b, c) block emits the output
        # directly in [B, O, C] layout (lane-dense when tC is a 128-multiple).
        denom = jnp.maximum(msum_ref[...], 1e-6)               # [O, 1]
        out_ref[0] = (acc_ref[...].T / denom).astype(out_ref.dtype)


def memory_encoder_3d(memory_feat, memory_mask, *, s_tile=None, c_tile=None):
    """
    memory_feat: [B, feature_dim, D, H, W]  float32
    memory_mask: [B, num_objects, D, H, W]  float (f32 / bf16 / f16; 0/1 masks
                 are exact in any of these)
    Returns (pixel_memory, object_embeddings) matching the PyTorch module:
      pixel_memory:      [B, feature_dim, D, H, W]  (identity)
      object_embeddings: [B, num_objects, feature_dim]
    """
    B, C, D, H, W = memory_feat.shape
    O = memory_mask.shape[1]
    S = D * H * W

    # Pure reshapes only: no padding and no dtype copies in the wrapper (each
    # would be an extra full HBM round trip for this bandwidth-bound kernel).
    feat = memory_feat.reshape(B, C, S)
    mask = memory_mask.reshape(B, O, S)

    if c_tile is None:
        # Exactly-2-way channel split so both v7x TensorCores get work when
        # B == 1.  c_tile must stay a multiple of 128 so the [B, O, C] output
        # block stays lane-dense -> require C % 256 == 0.  The mask re-stream
        # cost of the second C block is negligible (O << C), so this is also
        # harmless on single-TC v5e/v6e.
        if B == 1 and C >= 256 and C % 256 == 0:
            c_tile = C // 2
        else:
            c_tile = C
    assert C % c_tile == 0, "c_tile must divide feature_dim"

    feat_bytes = memory_feat.dtype.itemsize
    mask_bytes = memory_mask.dtype.itemsize
    out_bytes = feat_bytes

    # Generation-aware VMEM sizing.
    try:
        vmem_cap = int(pltpu.get_tpu_info().vmem_capacity_bytes)
    except Exception:  # pragma: no cover - conservative fallback (v7x-sized)
        vmem_cap = 64 * _MIB
    vmem_target = min((vmem_cap * 3) // 4, 64 * _MIB)   # ~48 MiB v7x, 64 MiB v5e/v6e

    # Per-lane cost of the double-buffered input tiles, plus the s_tile-
    # independent allocations (double-buffered out block + scratch).
    mask_sub = _round_up(O, max(32 // mask_bytes, 8))    # sublane padding of mask tile
    per_lane = (2 * _round_up(c_tile, 8) * feat_bytes
                + 2 * mask_sub * mask_bytes)
    fixed = (2 * _round_up(O, 8) * _round_up(c_tile, 128) * out_bytes  # out dbl-buf
             + _round_up(c_tile, 8) * _round_up(O, 128) * 4            # acc scratch
             + 8 * 128 * 4)                                            # msum scratch

    if s_tile is None:
        if S <= 128:
            s_tile = S                                   # full-dim lane tile
        else:
            budget = vmem_target - 2 * _MIB - fixed
            max_ts = max(128, (budget // per_lane) // 128 * 128)
            # Cap so each (b, c) block keeps a few S steps of DMA/compute
            # overlap; also never exceed the 128-aligned floor of S (no block
            # larger than the array extent).
            s_tile = int(min(max_ts, 4096, (S // 128) * 128))
    else:
        s_tile = int(s_tile)
    assert s_tile >= 1

    num_s = pl.cdiv(S, s_tile)
    has_tail = (S % s_tile) != 0
    grid = (B, C // c_tile, num_s)

    vmem_need = fixed + per_lane * _round_up(s_tile, 128)
    vmem_limit = int(min(max(vmem_need + 2 * _MIB, 16 * _MIB), vmem_cap - 4 * _MIB))

    kernel = functools.partial(
        _memory_encoder_kernel, total_s=S, s_tile=s_tile, has_tail=has_tail)

    object_embeddings = pl.pallas_call(
        kernel,
        out_shape=jax.ShapeDtypeStruct((B, O, C), memory_feat.dtype),
        grid_spec=pltpu.PrefetchScalarGridSpec(
            num_scalar_prefetch=0,
            grid=grid,
            in_specs=[
                pl.BlockSpec((1, c_tile, s_tile), lambda b, c, s: (b, c, s)),
                pl.BlockSpec((1, O, s_tile), lambda b, c, s: (b, 0, s)),
            ],
            out_specs=pl.BlockSpec((1, O, c_tile), lambda b, c, s: (b, 0, c)),
            scratch_shapes=[
                pltpu.VMEM((c_tile, O), jnp.float32),   # feat*mask accumulator
                pltpu.VMEM((O, 1), jnp.float32),        # mask-sum accumulator
            ],
        ),
        compiler_params=pltpu.CompilerParams(
            dimension_semantics=("parallel", "parallel", "arbitrary"),
            vmem_limit_bytes=vmem_limit,
        ),
    )(feat, mask)

    pixel_memory = memory_feat  # identity pass-through, as in the PyTorch module
    return pixel_memory, object_embeddings


def _reference(memory_feat, memory_mask):
    B, C = memory_feat.shape[:2]
    O = memory_mask.shape[1]
    feat = memory_feat.reshape(B, C, -1).astype(jnp.float32)   # [B, C, S]
    mask = memory_mask.reshape(B, O, -1).astype(jnp.float32)   # [B, O, S]
    sum_feat = jnp.einsum("bos,bcs->boc", mask, feat)
    sum_mask = jnp.clip(mask.sum(-1), 1e-6, None)              # [B, O]
    return memory_feat, sum_feat / sum_mask[..., None]


def _check(memory_feat, memory_mask):
    pixel_memory, obj_emb = memory_encoder_3d(memory_feat, memory_mask)
    jax.block_until_ready((pixel_memory, obj_emb))
    ref_pixel, ref_emb = _reference(memory_feat, memory_mask)
    B, C = memory_feat.shape[0], memory_feat.shape[1]
    O = memory_mask.shape[1]
    assert pixel_memory.shape == memory_feat.shape
    assert obj_emb.shape == (B, O, C)
    assert obj_emb.dtype == memory_feat.dtype
    assert jnp.allclose(pixel_memory, ref_pixel)
    assert jnp.allclose(obj_emb, ref_emb, atol=1e-5, rtol=1e-4)


if __name__ == "__main__":
    key = jax.random.PRNGKey(0)
    k_feat, k_mask, k_feat2, k_mask2, k_feat3, k_mask3 = jax.random.split(key, 6)

    # Primary case: feature_dim=32, num_objects=2, D=4, H=8, W=8 (S = 256).
    B, C, O, D, H, W = 2, 32, 2, 4, 8, 8
    memory_feat = jax.random.normal(k_feat, (B, C, D, H, W), dtype=jnp.float32)
    memory_mask = (jax.random.uniform(k_mask, (B, O, D, H, W)) > 0.5).astype(
        jnp.float32
    )
    _check(memory_feat, memory_mask)

    # Secondary case: non-128-aligned S handled as a full-dim lane tile
    # (S = 105, no padding), the exactly-2-way channel split (B=1, C=256 ->
    # two 128-channel blocks for the v7x TensorCores), and a caller-provided
    # bf16 binary mask (halved mask HBM traffic, exact 0/1 values).
    B2, C2, O2, D2, H2, W2 = 1, 256, 4, 3, 5, 7   # S = 105
    memory_feat2 = jax.random.normal(
        k_feat2, (B2, C2, D2, H2, W2), dtype=jnp.float32
    )
    memory_mask2 = (jax.random.uniform(k_mask2, (B2, O2, D2, H2, W2)) > 0.5).astype(
        jnp.bfloat16
    )
    _check(memory_feat2, memory_mask2)

    # Third case: S = 520 (multi-step S reduction with a partial last block)
    # exercises the in-kernel tail masking path with zero wrapper padding.
    B3, C3, O3, D3, H3, W3 = 1, 32, 2, 4, 10, 13   # S = 520
    memory_feat3 = jax.random.normal(
        k_feat3, (B3, C3, D3, H3, W3), dtype=jnp.float32
    )
    memory_mask3 = (jax.random.uniform(k_mask3, (B3, O3, D3, H3, W3)) > 0.5).astype(
        jnp.float32
    )
    _check(memory_feat3, memory_mask3)

    print("KERNEL_OK")
</pallas_src>

<mosaic_0001>
module attributes {stable_mosaic.version = 11 : i64} {
  func.func @_memory_encoder_kernel(%arg0: i32, %arg1: i32, %arg2: i32, %arg3: memref<1x32x256xf32, #tpu.memory_space<vmem>>, %arg4: memref<1x2x256xf32, #tpu.memory_space<vmem>>, %arg5: memref<1x2x32xf32, #tpu.memory_space<vmem>>, %arg6: memref<32x2xf32, #tpu.memory_space<vmem>>, %arg7: memref<2x1xf32, #tpu.memory_space<vmem>>) attributes {dimension_semantics = [#tpu.dimension_semantics<parallel>, #tpu.dimension_semantics<parallel>, #tpu.dimension_semantics<arbitrary>], iteration_bounds = array<i64: 2, 1, 1>, scalar_prefetch = 0 : i64, scratch_operands = 2 : i64, tpu.core_type = #tpu.core_type<tc>, window_params = [{transform_indices = @transform_0, window_bounds = array<i64: 1, 32, 256>}, {transform_indices = @transform_1, window_bounds = array<i64: 1, 2, 256>}, {transform_indices = @transform_2, window_bounds = array<i64: 1, 2, 32>}]} {
    %c0_i32 = arith.constant 0 : i32
    %0 = arith.cmpi eq, %arg2, %c0_i32 : i32
    %1 = arith.extui %0 : i1 to i32
    %c0_i32_0 = arith.constant 0 : i32
    %2 = arith.cmpi ne, %1, %c0_i32_0 : i32
    scf.if %2 {
      %cst_17 = arith.constant 0.000000e+00 : f32
      %19 = vector.broadcast %cst_17 : f32 to vector<32x2xf32>
      %c0_18 = arith.constant 0 : index
      %c0_19 = arith.constant 0 : index
      %20 = vector.load %arg6[%c0_18, %c0_19] : memref<32x2xf32, #tpu.memory_space<vmem>>, vector<32x2xf32>
      tpu.vector_store %arg6[%c0_18, %c0_19], %19 {strides = array<i32>} : memref<32x2xf32, #tpu.memory_space<vmem>>, vector<32x2xf32>,
      %cst_20 = arith.constant 0.000000e+00 : f32
      %21 = vector.broadcast %cst_20 : f32 to vector<2x1xf32>
      %c0_21 = arith.constant 0 : index
      %c0_22 = arith.constant 0 : index
      %22 = vector.load %arg7[%c0_21, %c0_22] : memref<2x1xf32, #tpu.memory_space<vmem>>, vector<2x1xf32>
      tpu.vector_store %arg7[%c0_21, %c0_22], %21 {strides = array<i32>} : memref<2x1xf32, #tpu.memory_space<vmem>>, vector<2x1xf32>,
    } else {
    }
    %c0 = arith.constant 0 : index
    %c0_1 = arith.constant 0 : index
    %c0_2 = arith.constant 0 : index
    %3 = vector.load %arg3[%c0, %c0_1, %c0_2] : memref<1x32x256xf32, #tpu.memory_space<vmem>>, vector<1x32x256xf32>
    %4 = vector.shape_cast %3 : vector<1x32x256xf32> to vector<32x256xf32>
    %c0_3 = arith.constant 0 : index
    %c0_4 = arith.constant 0 : index
    %c0_5 = arith.constant 0 : index
    %5 = vector.load %arg4[%c0_3, %c0_4, %c0_5] : memref<1x2x256xf32, #tpu.memory_space<vmem>>, vector<1x2x256xf32>
    %6 = vector.shape_cast %5 : vector<1x2x256xf32> to vector<2x256xf32>
    %c0_6 = arith.constant 0 : index
    %c0_7 = arith.constant 0 : index
    %7 = vector.load %arg6[%c0_6, %c0_7] : memref<32x2xf32, #tpu.memory_space<vmem>>, vector<32x2xf32>
    %cst = arith.constant dense<0.000000e+00> : vector<32x2xf32>
    %8 = tpu.matmul %4, %6, %cst {dimension_numbers = #tpu.dot_dimension_numbers<[1], [1], [0], [0], [0, 0, 1, 0], [], []>} : vector<32x256xf32>, vector<2x256xf32>, vector<32x2xf32> -> vector<32x2xf32>
    %9 = arith.addf %7, %8 : vector<32x2xf32>
    %c0_8 = arith.constant 0 : index
    %c0_9 = arith.constant 0 : index
    %10 = vector.load %arg6[%c0_8, %c0_9] : memref<32x2xf32, #tpu.memory_space<vmem>>, vector<32x2xf32>
    tpu.vector_store %arg6[%c0_8, %c0_9], %9 {strides = array<i32>} : memref<32x2xf32, #tpu.memory_space<vmem>>, vector<32x2xf32>,
    %c0_10 = arith.constant 0 : index
    %c0_11 = arith.constant 0 : index
    %11 = vector.load %arg7[%c0_10, %c0_11] : memref<2x1xf32, #tpu.memory_space<vmem>>, vector<2x1xf32>
    %cst_12 = arith.constant dense<0.000000e+00> : vector<2xf32>
    %12 = vector.multi_reduction <add>, %6, %cst_12 [1] : vector<2x256xf32> to vector<2xf32>
    %13 = vector.shape_cast %12 : vector<2xf32> to vector<2x1xf32>
    %14 = arith.addf %11, %13 : vector<2x1xf32>
    %c0_13 = arith.constant 0 : index
    %c0_14 = arith.constant 0 : index
    %15 = vector.load %arg7[%c0_13, %c0_14] : memref<2x1xf32, #tpu.memory_space<vmem>>, vector<2x1xf32>
    tpu.vector_store %arg7[%c0_13, %c0_14], %14 {strides = array<i32>} : memref<2x1xf32, #tpu.memory_space<vmem>>, vector<2x1xf32>,
    %c0_i32_15 = arith.constant 0 : i32
    %16 = arith.cmpi eq, %arg2, %c0_i32_15 : i32
    %17 = arith.extui %16 : i1 to i32
    %c0_i32_16 = arith.constant 0 : i32
    %18 = arith.cmpi ne, %17, %c0_i32_16 : i32
    scf.if %18 {
      %c0_17 = arith.constant 0 : index
      %c0_18 = arith.constant 0 : index
      %19 = vector.load %arg7[%c0_17, %c0_18] : memref<2x1xf32, #tpu.memory_space<vmem>>, vector<2x1xf32>
      %cst_19 = arith.constant 9.99999997E-7 : f32
      %20 = vector.broadcast %cst_19 : f32 to vector<2x1xf32>
      %21 = arith.maximumf %19, %20 : vector<2x1xf32>
      %c0_20 = arith.constant 0 : index
      %c0_21 = arith.constant 0 : index
      %22 = vector.load %arg6[%c0_20, %c0_21] : memref<32x2xf32, #tpu.memory_space<vmem>>, vector<32x2xf32>
      %23 = tpu.transpose %22, [1, 0] : vector<32x2xf32> -> vector<2x32xf32>
      %24 = vector.broadcast %21 : vector<2x1xf32> to vector<2x32xf32>
      %25 = arith.divf %23, %24 : vector<2x32xf32>
      %c0_22 = arith.constant 0 : index
      %c0_23 = arith.constant 0 : index
      %c0_24 = arith.constant 0 : index
      %26 = vector.load %arg5[%c0_22, %c0_23, %c0_24] : memref<1x2x32xf32, #tpu.memory_space<vmem>>, vector<1x2x32xf32>
      %27 = vector.shape_cast %26 : vector<1x2x32xf32> to vector<2x32xf32>
      %28 = vector.shape_cast %25 : vector<2x32xf32> to vector<1x2x32xf32>
      tpu.vector_store %arg5[%c0_22, %c0_23, %c0_24], %28 {strides = array<i32>} : memref<1x2x32xf32, #tpu.memory_space<vmem>>, vector<1x2x32xf32>,
    } else {
    }
    return
  }
  func.func @transform_0(%arg0: i32, %arg1: i32, %arg2: i32) -> (i32, i32, i32) {
    %c0_i32 = arith.constant 0 : i32
    return %arg0, %arg1, %arg2 : i32, i32, i32
  }
  func.func @transform_1(%arg0: i32, %arg1: i32, %arg2: i32) -> (i32, i32, i32) {
    %c0_i32 = arith.constant 0 : i32
    %c0_i32_0 = arith.constant 0 : i32
    return %arg0, %c0_i32, %arg2 : i32, i32, i32
  }
  func.func @transform_2(%arg0: i32, %arg1: i32, %arg2: i32) -> (i32, i32, i32) {
    %c0_i32 = arith.constant 0 : i32
    %c0_i32_0 = arith.constant 0 : i32
    return %arg0, %c0_i32, %arg1 : i32, i32, i32
  }
}

</mosaic_0001>

<llo_original>
// kernel: tpu_custom_call.1
$region0: #{tpu_custom_call.1}
  #allocation0 [shape = 'u32[]', space=smem, size = 0x4, offset = 0x4, fixed_abs, tag = 'smem constant byte address 0x4 - core index']
  #allocation1 [shape = 'u32[144,128]{1,0:T(1,128)}', space=vmem, size = 0x12000, scoped, tag = 'internal scratch']
  #allocation2 [shape = 'f32[32,2]{1,0:T(8,128)}', space=vmem, size = 0x4000, scoped, tag = 'scratch operand']
  #allocation3 [shape = 'f32[2,1]{1,0:T(2,128)}', space=vmem, size = 0x400, scoped, tag = 'scratch operand']
  %s0 = inlined_call_operand.hbm [shape: f32[2,32,256], index: 0, kind: input, shape index: {}]
  %s1 = inlined_call_operand.hbm [shape: f32[2,2,256], index: 1, kind: input, shape index: {}]
  %s2 = inlined_call_operand.hbm [shape: f32[2,2,32], index: 2, kind: output, shape index: {}]
  %s3 = sld [smem:[#allocation0]]
  $region57: #{tpu_custom_call.1} parent=0
    _
  %s5 = ssub.s32 1, %s3
  %s6 = scalar_select 0, %s5, %s3
  $region1: #{tpu_custom_call.1} parent=0
    #allocation4 [shape = 'u8[65536]{0}', space=vmem, size = 0x10000, scoped, tag = 'input window, operand 0']
    #allocation5 [shape = 's32[2]{0}', space=sflag, size = 0x8, scoped, tag = 'scoped memory for tpu_custom_call.1']
    #allocation6 [shape = 's32[2]{0}', space=sflag, size = 0x8, scoped, tag = 'scoped memory for tpu_custom_call.1']
    #allocation7 [shape = 'u8[4096]{0}', space=vmem, size = 0x1000, scoped, tag = 'input window, operand 1']
    #allocation8 [shape = 's32[2]{0}', space=sflag, size = 0x8, scoped, tag = 'scoped memory for tpu_custom_call.1']
    #allocation9 [shape = 'u8[2048]{0}', space=vmem, size = 0x800, scoped, tag = 'output window, operand 0']
    %7 = vsyncpa [#allocation5], 0
    %s8 = scalar_lea.sflag [#allocation5], 1
    %9 = vsyncpa %s8, 0
    %10 = vsyncpa [#allocation8], 0
    %s11 = scalar_lea.sflag [#allocation8], 1
    %12 = vsyncpa %s11, 0
    %13 = vsyncpa [#allocation6], 0
    %s14 = scalar_lea.sflag [#allocation6], 1
    %15 = vsyncpa %s14, 0
    loop: start=0, step=1, limit=4
    $region2: #{tpu_custom_call.1} parent=1 // loop_pre_header
      _
    $region3: #{tpu_custom_call.1} parent=1 // loop_header
      %s17 = sphi 0, %s21
      %p18 = scmp.ge.s32.totalorder %s17, 4
      %s24 = sphi 0, %s43
      %s25 = sphi 0, %s39
      %s26 = sphi 0, %s35
      %s27 = sphi 0, %s24
      %s28 = sphi 0, %s25
      %s29 = sphi 0, %s26
      %s30 = sphi 0, %s27
      %s31 = sphi 0, %s28
      %s32 = sphi 0, %s29
      %s50 = sphi 0, %s52
      %s53 = sphi 0, %s50
      %s54 = sphi 0, %s53
      %s70 = sphi 0, %s54
      %s78 = sphi 0, %s80
      %s81 = sphi 0, %s78
      %s82 = sphi 0, %s81
      %s98 = sphi 0, %s82
      %s106 = sphi 0, %s108
      %s109 = sphi 0, %s106
      %s110 = sphi 0, %s109
      %s126 = sphi 0, %s110
    $region4: #{tpu_custom_call.1} parent=1 // loop_header_branch
      %20 = sbr.rel (%p18) target = $region8
    $region5: #{tpu_custom_call.1} parent=1 // loop_body
      %s22 = ssub.s32 %s17, 1
      %s23 = ssub.s32 %s17, 2
      %s33 = sadd.s32 1, %s26
      %p34 = scmp.ge.s32.totalorder %s33, 1
      %s35 = scalar_select %p34, 0, %s33
      %s36 = sadd.s32 1, %s25
      %s37 = scalar_select %p34, %s36, %s25
      %p38 = scmp.ge.s32.totalorder %s37, 1
      %s39 = scalar_select %p38, 0, %s37
      %s40 = sadd.s32 1, %s24
      %s41 = scalar_select %p38, %s40, %s24
      %p42 = scmp.ge.s32.totalorder %s41, 2
      %s43 = scalar_select %p42, 0, %s41
      %s44 = ssub.s32 %s24, %s43
      %s45 = ssub.s32 %s25, %s39
      %s46 = sor.u32 %s44, %s45
      %s47 = ssub.s32 %s26, %s35
      %s48 = sor.u32 %s46, %s47
      %p49 = scmp.eq.s32.totalorder %s48, 0
      %s51 = sadd.s32 %s50, 1
      %s52 = scalar_select %p49, %s50, %s51
      %p55 = pneg %p49
      %p56 = scmp.eq.s32.totalorder %s17, 1
      %p57 = por %p55, %p56
      %p58 = scmp.ne.s32.totalorder %s50, %s53
      %p59 = scmp.eq.s32.totalorder %s17, 0
      %p60 = por %p58, %p59
      %p61 = scmp.ne.s32.totalorder %s50, %s53
      %p62 = scmp.eq.s32.totalorder %s22, 1
      %p63 = por %p61, %p62
      %p64 = scmp.ne.s32.totalorder %s53, %s54
      %p65 = scmp.eq.s32.totalorder %s22, 0
      %p66 = por %p64, %p65
      %p67 = scmp.ne.s32.totalorder %s53, %s54
      %p68 = scmp.eq.s32.totalorder %s23, 1
      %p69 = por %p67, %p68
      %p71 = scmp.ne.s32.totalorder %s54, %s70
      %p72 = scmp.eq.s32.totalorder %s23, 0
      %p73 = por %p71, %p72
      %s74 = ssub.s32 %s24, %s43
      %s75 = ssub.s32 %s26, %s35
      %s76 = sor.u32 %s74, %s75
      %p77 = scmp.eq.s32.totalorder %s76, 0
      %s79 = sadd.s32 %s78, 1
      %s80 = scalar_select %p77, %s78, %s79
      %p83 = pneg %p77
      %p84 = scmp.eq.s32.totalorder %s17, 1
      %p85 = por %p83, %p84
      %p86 = scmp.ne.s32.totalorder %s78, %s81
      %p87 = scmp.eq.s32.totalorder %s17, 0
      %p88 = por %p86, %p87
      %p89 = scmp.ne.s32.totalorder %s78, %s81
      %p90 = scmp.eq.s32.totalorder %s22, 1
      %p91 = por %p89, %p90
      %p92 = scmp.ne.s32.totalorder %s81, %s82
      %p93 = scmp.eq.s32.totalorder %s22, 0
      %p94 = por %p92, %p93
      %p95 = scmp.ne.s32.totalorder %s81, %s82
      %p96 = scmp.eq.s32.totalorder %s23, 1
      %p97 = por %p95, %p96
      %p99 = scmp.ne.s32.totalorder %s82, %s98
      %p100 = scmp.eq.s32.totalorder %s23, 0
      %p101 = por %p99, %p100
      %s102 = ssub.s32 %s24, %s43
      %s103 = ssub.s32 %s25, %s39
      %s104 = sor.u32 %s102, %s103
      %p105 = scmp.eq.s32.totalorder %s104, 0
      %s107 = sadd.s32 %s106, 1
      %s108 = scalar_select %p105, %s106, %s107
      %p111 = pneg %p105
      %p112 = scmp.eq.s32.totalorder %s17, 1
      %p113 = por %p111, %p112
      %p114 = scmp.ne.s32.totalorder %s106, %s109
      %p115 = scmp.eq.s32.totalorder %s17, 0
      %p116 = por %p114, %p115
      %p117 = scmp.ne.s32.totalorder %s106, %s109
      %p118 = scmp.eq.s32.totalorder %s22, 1
      %p119 = por %p117, %p118
      %p120 = scmp.ne.s32.totalorder %s109, %s110
      %p121 = scmp.eq.s32.totalorder %s22, 0
      %p122 = por %p120, %p121
      %p123 = scmp.ne.s32.totalorder %s109, %s110
      %p124 = scmp.eq.s32.totalorder %s23, 1
      %p125 = por %p123, %p124
      %p127 = scmp.ne.s32.totalorder %s110, %s126
      %p128 = scmp.eq.s32.totalorder %s23, 0
      %p129 = por %p127, %p128
      %p130 = scmp.le.s32.totalorder 1, %s17
      %p131 = scmp.lt.s32.totalorder %s17, 3
      %p132 = pnand %p130, %p131
      %p133 = pneg %p132
      // Predicated region
      $region9: #{tpu_custom_call.1} parent=5 // pred_check
        _
      $region10: #{tpu_custom_call.1} parent=5 // pred_check_branch
        %135 = sbr.rel (%p132) target = $region12
      $region11: #{tpu_custom_call.1} parent=5 // pred_region
        %s136 = ssub.s32 %s17, 1
      $region12: #{tpu_custom_call.1} parent=5 // pred_fallthru
        _
      %p137 = scmp.lt.s32.totalorder %s17, 2
      // Predicated region
      $region13: #{tpu_custom_call.1} parent=5 // pred_check
        %p138 = pneg %p137
      $region14: #{tpu_custom_call.1} parent=5 // pred_check_branch
        %140 = sbr.rel (%p138) target = $region16
      $region15: #{tpu_custom_call.1} parent=5 // pred_region
        // Predicated region
        $region17: #{tpu_custom_call.1} parent=15 // pred_check
          %p141 = pneg %p60
        $region18: #{tpu_custom_call.1} parent=15 // pred_check_branch
          %143 = sbr.rel (%p141) target = $region20
        $region19: #{tpu_custom_call.1} parent=15 // pred_region
          %s144 = sand.u32 %s50, 1
          %s145 = scalar_lea.sflag [#allocation5], %s144
          %s146 = sand.u32 %s50, 1
          %s147 = smul.addr %s146, 64
          %s148 = scalar_lea.vmem [#allocation4], %s147
          %s149 = smul.u32 4, %s25
          %s150 = smul.u32 2, %s26
          %s152 = ssub.s32 1024, 1024
          %153 = vsyncadd %s145, %s152
          %s154 = smul.addr %s149, 2
          %s155 = sadd.s32 %s150, %s154
          %s156 = smul.addr %s24, 8
          %s157 = sadd.s32 %s155, %s156
          %s158 = smul.addr %s157, 128
          %s159 = scalar_lea.hbm %s0, %s158
          %s160 = sshll.u32 %s148, 4
          %s161 = int_to_ptr.vmem [resolvable:$true] %s160
          %166 = dma.hbm_to_vmem [thread:$0]  %s159, 1024, %s161, %s145, 256, 256, 16
        $region20: #{tpu_custom_call.1} parent=15 // pred_fallthru
          _
        // Predicated region
        $region21: #{tpu_custom_call.1} parent=15 // pred_check
          %p167 = pneg %p88
        $region22: #{tpu_custom_call.1} parent=15 // pred_check_branch
          %169 = sbr.rel (%p167) target = $region24
        $region23: #{tpu_custom_call.1} parent=15 // pred_region
          %s170 = sand.u32 %s78, 1
          %s171 = scalar_lea.sflag [#allocation8], %s170
          %s172 = sand.u32 %s78, 1
          %s173 = smul.addr %s172, 4
          %s174 = scalar_lea.vmem [#allocation7], %s173
          %s175 = smul.u32 2, %s26
          %s177 = ssub.s32 64, 64
          %178 = vsyncadd %s171, %s177
          %s179 = smul.addr %s24, 2
          %s180 = sadd.s32 %s175, %s179
          %s181 = smul.addr %s180, 32
          %s182 = scalar_lea.hbm %s1, %s181
          %s184 = sshll.u32 %s174, 4
          %s185 = int_to_ptr.vmem [resolvable:$true] %s184
          %187 = dma.hbm_to_vmem [thread:$0]  %s182, 64, %s185, %s171
        $region24: #{tpu_custom_call.1} parent=15 // pred_fallthru
          _
      $region16: #{tpu_custom_call.1} parent=5 // pred_fallthru
        _
      %p188 = scmp.le.s32.totalorder 1, %s17
      %p189 = scmp.lt.s32.totalorder %s17, 3
      %p190 = pnand %p188, %p189
      %p191 = pneg %p190
      // Predicated region
      $region25: #{tpu_custom_call.1} parent=5 // pred_check
        _
      $region26: #{tpu_custom_call.1} parent=5 // pred_check_branch
        %193 = sbr.rel (%p190) target = $region28
      $region27: #{tpu_custom_call.1} parent=5 // pred_region
        %s194 = ssub.s32 %s17, 1
        %s195 = sand.u32 %s53, 1
        %s196 = scalar_lea.sflag [#allocation5], %s195
        %s197 = sand.u32 %s53, 1
        %s198 = smul.addr %s197, 64
        %s199 = scalar_lea.vmem [#allocation4], %s198
        // Predicated region
        $region29: #{tpu_custom_call.1} parent=27 // pred_check
          %p200 = pneg %p66
        $region30: #{tpu_custom_call.1} parent=27 // pred_check_branch
          %202 = sbr.rel (%p200) target = $region32
        $region31: #{tpu_custom_call.1} parent=27 // pred_region
          %203 = dma.done %s196, 1024
        $region32: #{tpu_custom_call.1} parent=27 // pred_fallthru
          _
        %s204 = sand.u32 %s81, 1
        %s205 = scalar_lea.sflag [#allocation8], %s204
        %s206 = sand.u32 %s81, 1
        %s207 = smul.addr %s206, 4
        %s208 = scalar_lea.vmem [#allocation7], %s207
        // Predicated region
        $region33: #{tpu_custom_call.1} parent=27 // pred_check
          %p209 = pneg %p94
        $region34: #{tpu_custom_call.1} parent=27 // pred_check_branch
          %211 = sbr.rel (%p209) target = $region36
        $region35: #{tpu_custom_call.1} parent=27 // pred_region
          %212 = dma.done %s205, 64
        $region36: #{tpu_custom_call.1} parent=27 // pred_fallthru
          _
        %s213 = sand.u32 %s53, 1
        %s214 = scalar_lea.sflag [#allocation5], %s213
        %s215 = sand.u32 %s53, 1
        %s216 = smul.addr %s215, 64
        %s217 = scalar_lea.vmem [#allocation4], %s216
        %p218 = pneg %p66
        %p219 = pneg %p63
        %s220 = sand.u32 %s81, 1
        %s221 = scalar_lea.sflag [#allocation8], %s220
        %s222 = sand.u32 %s81, 1
        %s223 = smul.addr %s222, 4
        %s224 = scalar_lea.vmem [#allocation7], %s223
        %p225 = pneg %p94
        %p226 = pneg %p91
        %p227 = pneg %p122
        %p228 = pneg %p119
        %s229 = sand.u32 %s109, 1
        %s230 = scalar_lea.sflag [#allocation6], %s229
        %s231 = sand.u32 %s109, 1
        %s232 = smul.addr %s231, 2
        %s233 = scalar_lea.vmem [#allocation9], %s232
        %s234 = smul.u32 4, %s28
        %s235 = smul.u32 2, %s29
        %s236 = smul.u32 2, %s29
        %p237 = scmp.eq.s32.totalorder %s29, 0
        // Predicated region
        $region37: #{tpu_custom_call.1} parent=27 // pred_check
          %p238 = pneg %p237
        $region38: #{tpu_custom_call.1} parent=27 // pred_check_branch
          %240 = sbr.rel (%p238) target = $region40
        $region39: #{tpu_custom_call.1} parent=27 // pred_region
          %vm241 = vcmask 15360
          %242 = vst.msk [vmem:[#allocation2] sm:$0xff] %vm241, 0.0
          %243 = vst.msk [vmem:[#allocation2 + $0x8] sm:$0xff] %vm241, 0.0
          %244 = vst.msk [vmem:[#allocation2 + $0x10] sm:$0xff] %vm241, 0.0
          %245 = vst.msk [vmem:[#allocation2 + $0x18] sm:$0xff] %vm241, 0.0
          %vm246 = vcmask 1024
          %247 = vst.msk [vmem:[#allocation3] sm:$0x3] %vm246, 0.0
        $region40: #{tpu_custom_call.1} parent=27 // pred_fallthru
          _
        %v248 = vld [vmem:[%s199] sm:$0xff]
        %v249 = vld [vmem:[%s199 + $0x8] sm:$0xff]
        %v250 = vld [vmem:[%s199 + $0x10] sm:$0xff]
        %v251 = vld [vmem:[%s199 + $0x18] sm:$0xff]
        %v252 = vld [vmem:[%s199 + $0x20] sm:$0xff]
        %v253 = vld [vmem:[%s199 + $0x28] sm:$0xff]
        %v254 = vld [vmem:[%s199 + $0x30] sm:$0xff]
        %v255 = vld [vmem:[%s199 + $0x38] sm:$0xff]
        %v256 = vld [vmem:[%s208] sm:$0xf]
        %v257 = vld [vmem:[#allocation2] sm:$0xff]
        %v258 = vld [vmem:[#allocation2 + $0x8] sm:$0xff]
        %v259 = vld [vmem:[#allocation2 + $0x10] sm:$0xff]
        %v260 = vld [vmem:[#allocation2 + $0x18] sm:$0xff]
        %v263 = vunpack.c.l.s4 1983009808
        %v264 = vunpack.c.0.s8 %v263
        %v265 = vlaneseq
        %v266 = vshrl.u32 %v265, 7
        %v267 = vsub.s32 %v264, %v266
        %v268 = vrot.slane %v256, %v267
        %v269 = vcombine.high %v268, %v268
        %272 = vmatprep.subr.mxu0 %v269
        %273 = vmatpush1.xpose.msra.mxu0 %v268
        %274 = vmatprep.subr.mxu0 0.0
        %275 = vmatpush1.xpose.msra.mxu0 0.0
        %276 = vmatprep.subr.mxu0 0.0
        %277 = vmatpush1.xpose.msra.mxu0 0.0
        %278 = vmatprep.subr.mxu0 0.0
        %279 = vmatpush1.xpose.msra.mxu0 0.0
        %280 = vmatprep.subr.mxu0 0.0
        %281 = vmatpush1.xpose.msra.mxu0 0.0
        %282 = vmatprep.subr.mxu0 0.0
        %283 = vmatpush1.xpose.msra.mxu0 0.0
        %284 = vmatprep.subr.mxu0 0.0
        %285 = vmatpush1.xpose.msra.mxu0 0.0
        %286 = vmatprep.subr.mxu0 0.0
        %287 = vmatpush1.xpose.msra.mxu0 0.0
        %288 = vmatprep.subr.mxu0 0.0
        %289 = vmatpush1.xpose.msra.mxu0 0.0
        %290 = vmatprep.subr.mxu0 0.0
        %291 = vmatpush1.xpose.msra.mxu0 0.0
        %292 = vmatprep.subr.mxu0 0.0
        %293 = vmatpush1.xpose.msra.mxu0 0.0
        %294 = vmatprep.subr.mxu0 0.0
        %295 = vmatpush1.xpose.msra.mxu0 0.0
        %296 = vmatprep.subr.mxu0 0.0
        %297 = vmatpush1.xpose.msra.mxu0 0.0
        %298 = vmatprep.subr.mxu0 0.0
        %299 = vmatpush1.xpose.msra.mxu0 0.0
        %300 = vmatprep.subr.mxu0 0.0
        %301 = vmatpush1.xpose.msra.mxu0 0.0
        %302 = vmatprep.subr.mxu0 0.0
        %303 = vmatpush1.xpose.msra.mxu0 0.0
        %304 = vmatprep.subr.mxu0 0.0
        %305 = vmatpush1.xpose.msra.mxu0 0.0
        %306 = vmatprep.subr.mxu0 0.0
        %307 = vmatpush1.xpose.msra.mxu0 0.0
        %308 = vmatprep.subr.mxu0 0.0
        %309 = vmatpush1.xpose.msra.mxu0 0.0
        %310 = vmatprep.subr.mxu0 0.0
        %311 = vmatpush1.xpose.msra.mxu0 0.0
        %312 = vmatprep.subr.mxu0 0.0
        %313 = vmatpush1.xpose.msra.mxu0 0.0
        %314 = vmatprep.subr.mxu0 0.0
        %315 = vmatpush1.xpose.msra.mxu0 0.0
        %316 = vmatprep.subr.mxu0 0.0
        %317 = vmatpush1.xpose.msra.mxu0 0.0
        %318 = vmatprep.subr.mxu0 0.0
        %319 = vmatpush1.xpose.msra.mxu0 0.0
        %320 = vmatprep.subr.mxu0 0.0
        %321 = vmatpush1.xpose.msra.mxu0 0.0
        %322 = vmatprep.subr.mxu0 0.0
        %323 = vmatpush1.xpose.msra.mxu0 0.0
        %324 = vmatprep.subr.mxu0 0.0
        %325 = vmatpush1.xpose.msra.mxu0 0.0
        %326 = vmatprep.subr.mxu0 0.0
        %327 = vmatpush1.xpose.msra.mxu0 0.0
        %328 = vmatprep.subr.mxu0 0.0
        %329 = vmatpush1.xpose.msra.mxu0 0.0
        %330 = vmatprep.subr.mxu0 0.0
        %331 = vmatpush1.xpose.msra.mxu0 0.0
        %332 = vmatprep.subr.mxu0 0.0
        %333 = vmatpush1.xpose.msra.mxu0 0.0
        %334 = vmatprep.subr.mxu0 0.0
        %335 = vmatpush1.xpose.msra.mxu0 0.0
        %336 = vmatprep.mubr.f32.mxu0 %v249
        %337 = vmatmul.mubr.f32.gmra.mrb[0].mxu0 %v248
        %v338 = vpop.f32.mrb[0].mxu0
        %v339 = vadd.f32 0.0, %v338
        %v340 = vpop.f32.mrb[0].mxu0
        %341 = vmatprep.mubr.f32.mxu0 %v251
        %342 = vmatmul.mubr.f32.gmra.mrb[0].mxu0 %v250
        %v343 = vpop.f32.mrb[0].mxu0
        %v344 = vadd.f32 0.0, %v343
        %v345 = vpop.f32.mrb[0].mxu0
        %346 = vmatprep.mubr.f32.mxu0 %v253
        %347 = vmatmul.mubr.f32.gmra.mrb[0].mxu0 %v252
        %v348 = vpop.f32.mrb[0].mxu0
        %v349 = vadd.f32 0.0, %v348
        %v350 = vpop.f32.mrb[0].mxu0
        %351 = vmatprep.mubr.f32.mxu0 %v255
        %352 = vmatmul.mubr.f32.gmra.mrb[0].mxu0 %v254
        %v353 = vpop.f32.mrb[0].mxu0
        %v354 = vadd.f32 0.0, %v353
        %v355 = vpop.f32.mrb[0].mxu0
        %356 = vdwg.mxu0
        %v357 = vadd.f32 %v257, %v339
        %v358 = vadd.f32 %v258, %v344
        %v359 = vadd.f32 %v259, %v349
        %v360 = vadd.f32 %v260, %v354
        %vm361 = vcmask 15360
        %362 = vst.msk [vmem:[#allocation2] sm:$0xff] %vm361, %v357
        %363 = vst.msk [vmem:[#allocation2 + $0x8] sm:$0xff] %vm361, %v358
        %364 = vst.msk [vmem:[#allocation2 + $0x10] sm:$0xff] %vm361, %v359
        %365 = vst.msk [vmem:[#allocation2 + $0x18] sm:$0xff] %vm361, %v360
        %v366 = vld [vmem:[#allocation3] sm:$0x3]
        %vm367 = vcmask 1041408
        %v368 = vsel %vm367, %v268, 0.0
        %v369 = vsel %vm367, %v269, 0.0
        %v370 = vadd.f32 %v368, %v369
        %371 = vadd.xlane.f32.xlu0 %v370
        %v372 = vpop.xlane.xlu0 %371
        %v373 = vadd.f32 %v366, %v372
        %vm374 = vcmask 1024
        %375 = vst.msk [vmem:[#allocation3] sm:$0x3] %vm374, %v373
        // Predicated region
        $region41: #{tpu_custom_call.1} parent=27 // pred_check
          %p376 = pneg %p237
        $region42: #{tpu_custom_call.1} parent=27 // pred_check_branch
          %378 = sbr.rel (%p376) target = $region44
        $region43: #{tpu_custom_call.1} parent=27 // pred_region
          %v379 = vld [vmem:[#allocation3] sm:$0x3]
          %v380 = vmax.f32 %v379, 1e-06
          %v381 = vld [vmem:[#allocation2] sm:$0xff]
          %v382 = vld [vmem:[#allocation2 + $0x8] sm:$0xff]
          %v383 = vld [vmem:[#allocation2 + $0x10] sm:$0xff]
          %v384 = vld [vmem:[#allocation2 + $0x18] sm:$0xff]
          %385 = vxpose.xlu0.b32.start [1/16] %v381, 128
          %386 = vxpose.xlu0.b32.cont [2/16] %v382, 128
          %387 = vxpose.xlu0.b32.cont [3/16] %v383, 128
          %388 = vxpose.xlu0.b32.cont [4/16] %v384, 128
          %389 = vxpose.xlu0.b32.cont [5/16] 0.0, 128
          %390 = vxpose.xlu0.b32.cont [6/16] 0.0, 128
          %391 = vxpose.xlu0.b32.cont [7/16] 0.0, 128
          %392 = vxpose.xlu0.b32.cont [8/16] 0.0, 128
          %393 = vxpose.xlu0.b32.cont [9/16] 0.0, 128
          %394 = vxpose.xlu0.b32.cont [10/16] 0.0, 128
          %395 = vxpose.xlu0.b32.cont [11/16] 0.0, 128
          %396 = vxpose.xlu0.b32.cont [12/16] 0.0, 128
          %397 = vxpose.xlu0.b32.cont [13/16] 0.0, 128
          %398 = vxpose.xlu0.b32.cont [14/16] 0.0, 128
          %399 = vxpose.xlu0.b32.cont [15/16] 0.0, 128
          %400 = vxpose.xlu0.b32.end [16/16] 0.0, 128
          %v401 = vpop.trf.xlu0
          %v402 = vpop.trf.xlu0
          %v403 = vpop.trf.xlu0
          %v404 = vpop.trf.xlu0
          %v405 = vpop.trf.xlu0
          %v406 = vpop.trf.xlu0
          %v407 = vpop.trf.xlu0
          %v408 = vpop.trf.xlu0
          %v409 = vpop.trf.xlu0
          %v410 = vpop.trf.xlu0
          %v411 = vpop.trf.xlu0
          %v412 = vpop.trf.xlu0
          %v413 = vpop.trf.xlu0
          %v414 = vpop.trf.xlu0
          %v415 = vpop.trf.xlu0
          %v416 = vpop.trf.xlu0
          %418 = vset.pattern.permute.xlu0 0
          %419 = vperm.xlu0 %418, %v380
          %v420 = vpop.permute.xlu0 %419
          %v422 = vrcp.pop %v420
          %v423 = vmul.f32 %v401, %v422
          %vm424 = vcmask 254976
          %425 = vst.msk [vmem:[%s233] sm:$0x3] %vm424, %v423
        $region44: #{tpu_custom_call.1} parent=27 // pred_fallthru
          _
        %s426 = sand.u32 %s109, 1
        %s427 = scalar_lea.sflag [#allocation6], %s426
        %s428 = sand.u32 %s109, 1
        %s429 = smul.addr %s428, 2
        %s430 = scalar_lea.vmem [#allocation9], %s429
        // Predicated region
        $region45: #{tpu_custom_call.1} parent=27 // pred_check
          %p431 = pneg %p119
        $region46: #{tpu_custom_call.1} parent=27 // pred_check_branch
          %433 = sbr.rel (%p431) target = $region48
        $region47: #{tpu_custom_call.1} parent=27 // pred_region
          %s435 = ssub.s32 32, 32
          %436 = vsyncadd %s427, %s435
          %s437 = sadd.s32 %s28, %s27
          %s438 = smul.addr %s437, 32
          %s439 = scalar_lea.hbm %s2, %s438
          %s441 = sshll.u32 %s430, 4
          %s442 = int_to_ptr.vmem [resolvable:$true] %s441
          %444 = dma.vmem_to_hbm [thread:$0]  %s442, 32, %s439, %s427
        $region48: #{tpu_custom_call.1} parent=27 // pred_fallthru
          _
      $region28: #{tpu_custom_call.1} parent=5 // pred_fallthru
        _
      %p445 = scmp.le.s32.totalorder 2, %s17
      // Predicated region
      $region49: #{tpu_custom_call.1} parent=5 // pred_check
        %p446 = pneg %p445
      $region50: #{tpu_custom_call.1} parent=5 // pred_check_branch
        %448 = sbr.rel (%p446) target = $region52
      $region51: #{tpu_custom_call.1} parent=5 // pred_region
        %s449 = ssub.s32 %s17, 2
        // Predicated region
        $region53: #{tpu_custom_call.1} parent=51 // pred_check
          %p450 = pneg %p125
        $region54: #{tpu_custom_call.1} parent=51 // pred_check_branch
          %452 = sbr.rel (%p450) target = $region56
        $region55: #{tpu_custom_call.1} parent=51 // pred_region
          %s453 = sand.u32 %s110, 1
          %s454 = scalar_lea.sflag [#allocation6], %s453
          %s455 = sand.u32 %s110, 1
          %s456 = smul.addr %s455, 2
          %s457 = scalar_lea.vmem [#allocation9], %s456
          %458 = dma.done %s454, 32
        $region56: #{tpu_custom_call.1} parent=51 // pred_fallthru
          _
      $region52: #{tpu_custom_call.1} parent=5 // pred_fallthru
        _
    $region6: #{tpu_custom_call.1} parent=1 // loop_footer
      %s21 = sadd.s32 1, %s17
    $region7: #{tpu_custom_call.1} parent=1 // loop_footer_branch
      %16 = sbr.rel target = $region3
    $region8: #{tpu_custom_call.1} parent=1 // loop_exit
      _
    %459 = vsyncpa [#allocation5], 1
    %s460 = scalar_lea.sflag [#allocation5], 1
    %461 = vsyncpa %s460, 1
    %462 = vsyncpa [#allocation8], 1
    %s463 = scalar_lea.sflag [#allocation8], 1
    %464 = vsyncpa %s463, 1
    %465 = vsyncpa [#allocation6], 1
    %s466 = scalar_lea.sflag [#allocation6], 1
    %467 = vsyncpa %s466, 1

</llo_original>
